<compile_context>
chip_gen: v5e
topology: v5e:2x2
jax: 0.10.0
libtpu: 0.0.40
codegen_flags: <defaults>
</compile_context>

<pallas_src>
import jax
import jax.numpy as jnp
from jax import lax
from jax.experimental import pallas as pl
from jax.experimental.pallas import tpu as pltpu


def _round_up(x, m):
    return ((x + m - 1) // m) * m


def _bmm_t_kernel(x1_ref, x2_ref, o_ref, acc_ref):
    # x1_ref: (tk, tm), x2_ref: (tk, tn), o_ref: (tm, tn), acc_ref: (tm, tn) f32
    k = pl.program_id(3)

    @pl.when(k == 0)
    def _():
        acc_ref[...] = jnp.zeros_like(acc_ref)

    # Contract over K (axis 0 of both tiles) == x1_tile.T @ x2_tile.
    acc_ref[...] += lax.dot_general(
        x1_ref[...], x2_ref[...],
        dimension_numbers=(((0,), (0,)), ((), ())),
        preferred_element_type=jnp.float32,
    )

    @pl.when(k == pl.num_programs(3) - 1)
    def _():
        o_ref[...] = acc_ref[...].astype(o_ref.dtype)


def bmm_transpose(x1, x2, *, tm=256, tn=256, tk=512):
    """Computes bmm(permute(x1, (0,2,1)), x2) with a tiled Pallas TPU kernel.

    x1: (B, K, M), x2: (B, K, N) -> (B, M, N)
    """
    B, K, M = x1.shape
    B2, K2, N = x2.shape
    assert B == B2 and K == K2

    # Cap tiles by the (aligned) problem size; keep (8,128) alignment for f32.
    tm = min(tm, _round_up(M, 128))
    tn = min(tn, _round_up(N, 128))
    tk = min(tk, _round_up(K, 8))
    Mp, Np, Kp = _round_up(M, tm), _round_up(N, tn), _round_up(K, tk)

    # Zero-pad: padded K rows contribute 0 to the contraction; padded M/N
    # rows/cols of the output are sliced off below.
    x1p = jnp.pad(x1, ((0, 0), (0, Kp - K), (0, Mp - M)))
    x2p = jnp.pad(x2, ((0, 0), (0, Kp - K), (0, Np - N)))

    grid = (B, Mp // tm, Np // tn, Kp // tk)
    itemsize = x1p.dtype.itemsize

    out = pl.pallas_call(
        _bmm_t_kernel,
        out_shape=jax.ShapeDtypeStruct((B, Mp, Np), x1.dtype),
        grid_spec=pltpu.PrefetchScalarGridSpec(
            num_scalar_prefetch=0,
            grid=grid,
            in_specs=[
                pl.BlockSpec((pl.Squeezed(), tk, tm),
                             lambda b, i, j, k: (b, k, i)),
                pl.BlockSpec((pl.Squeezed(), tk, tn),
                             lambda b, i, j, k: (b, k, j)),
            ],
            out_specs=pl.BlockSpec((pl.Squeezed(), tm, tn),
                                   lambda b, i, j, k: (b, i, j)),
            scratch_shapes=[pltpu.VMEM((tm, tn), jnp.float32)],
        ),
        compiler_params=pltpu.CompilerParams(
            dimension_semantics=("parallel", "parallel", "parallel", "arbitrary"),
        ),
        cost_estimate=pl.CostEstimate(
            flops=2 * B * Mp * Np * Kp,
            transcendentals=0,
            bytes_accessed=(x1p.size + x2p.size + B * Mp * Np) * itemsize,
        ),
    )(x1p, x2p)

    return out[:, :M, :N]


if __name__ == "__main__":
    key = jax.random.PRNGKey(0)
    k1, k2, k3, k4 = jax.random.split(key, 4)

    # 1) Exact module shapes: torch.bmm(x1.permute(0,2,1), x2) with (1, 2, 2).
    a1 = jax.random.normal(k1, (1, 2, 2), dtype=jnp.float32)
    a2 = jax.random.normal(k2, (1, 2, 2), dtype=jnp.float32)
    o1 = jax.block_until_ready(bmm_transpose(a1, a2))
    r1 = jnp.einsum("bkm,bkn->bmn", a1, a2)
    assert o1.shape == (1, 2, 2)
    assert jnp.allclose(o1, r1, atol=1e-5, rtol=1e-5)

    # 2) Slightly larger (still small) shapes with forced small tiles so the
    #    K-accumulation, multi-tile M/N grid, and pad/slice paths are exercised.
    b1 = jax.random.normal(k3, (2, 24, 160), dtype=jnp.float32)
    b2 = jax.random.normal(k4, (2, 24, 272), dtype=jnp.float32)
    o2 = jax.block_until_ready(bmm_transpose(b1, b2, tm=128, tn=128, tk=8))
    r2 = jnp.einsum("bkm,bkn->bmn", b1, b2)
    assert o2.shape == (2, 160, 272)
    assert jnp.allclose(o2, r2, atol=1e-4, rtol=1e-4)

    print("KERNEL_OK")
</pallas_src>

<mosaic_0001>
module attributes {stable_mosaic.version = 11 : i64} {
  func.func @_bmm_t_kernel(%arg0: i32, %arg1: i32, %arg2: i32, %arg3: i32, %arg4: memref<1x8x128xf32, #tpu.memory_space<vmem>>, %arg5: memref<1x8x128xf32, #tpu.memory_space<vmem>>, %arg6: memref<1x128x128xf32, #tpu.memory_space<vmem>>, %arg7: memref<128x128xf32, #tpu.memory_space<vmem>>) attributes {dimension_semantics = [#tpu.dimension_semantics<parallel>, #tpu.dimension_semantics<parallel>, #tpu.dimension_semantics<parallel>, #tpu.dimension_semantics<arbitrary>], iteration_bounds = array<i64: 1, 1, 1, 1>, scalar_prefetch = 0 : i64, scratch_operands = 1 : i64, tpu.core_type = #tpu.core_type<tc>, window_params = [{transform_indices = @transform_0, window_bounds = array<i64: 1, 8, 128>}, {transform_indices = @transform_1, window_bounds = array<i64: 1, 8, 128>}, {transform_indices = @transform_2, window_bounds = array<i64: 1, 128, 128>}]} {
    %c0_i32 = arith.constant 0 : i32
    %0 = arith.cmpi eq, %arg3, %c0_i32 : i32
    %1 = arith.extui %0 : i1 to i32
    %c0_i32_0 = arith.constant 0 : i32
    %2 = arith.cmpi ne, %1, %c0_i32_0 : i32
    scf.if %2 {
      %cst_12 = arith.constant 0.000000e+00 : f32
      %14 = vector.broadcast %cst_12 : f32 to vector<128x128xf32>
      %c0_13 = arith.constant 0 : index
      %c0_14 = arith.constant 0 : index
      %15 = vector.load %arg7[%c0_13, %c0_14] : memref<128x128xf32, #tpu.memory_space<vmem>>, vector<128x128xf32>
      tpu.vector_store %arg7[%c0_13, %c0_14], %14 {strides = array<i32>} : memref<128x128xf32, #tpu.memory_space<vmem>>, vector<128x128xf32>,
    } else {
    }
    %c0 = arith.constant 0 : index
    %c0_1 = arith.constant 0 : index
    %3 = vector.load %arg7[%c0, %c0_1] : memref<128x128xf32, #tpu.memory_space<vmem>>, vector<128x128xf32>
    %c0_2 = arith.constant 0 : index
    %c0_3 = arith.constant 0 : index
    %c0_4 = arith.constant 0 : index
    %4 = vector.load %arg4[%c0_2, %c0_3, %c0_4] : memref<1x8x128xf32, #tpu.memory_space<vmem>>, vector<1x8x128xf32>
    %5 = vector.shape_cast %4 : vector<1x8x128xf32> to vector<8x128xf32>
    %c0_5 = arith.constant 0 : index
    %c0_6 = arith.constant 0 : index
    %c0_7 = arith.constant 0 : index
    %6 = vector.load %arg5[%c0_5, %c0_6, %c0_7] : memref<1x8x128xf32, #tpu.memory_space<vmem>>, vector<1x8x128xf32>
    %7 = vector.shape_cast %6 : vector<1x8x128xf32> to vector<8x128xf32>
    %cst = arith.constant dense<0.000000e+00> : vector<128x128xf32>
    %8 = tpu.matmul %5, %7, %cst {dimension_numbers = #tpu.dot_dimension_numbers<[0], [0], [1], [1], [0, 1, 1, 1], [], []>} : vector<8x128xf32>, vector<8x128xf32>, vector<128x128xf32> -> vector<128x128xf32>
    %9 = arith.addf %3, %8 : vector<128x128xf32>
    %c0_8 = arith.constant 0 : index
    %c0_9 = arith.constant 0 : index
    %10 = vector.load %arg7[%c0_8, %c0_9] : memref<128x128xf32, #tpu.memory_space<vmem>>, vector<128x128xf32>
    tpu.vector_store %arg7[%c0_8, %c0_9], %9 {strides = array<i32>} : memref<128x128xf32, #tpu.memory_space<vmem>>, vector<128x128xf32>,
    %c0_i32_10 = arith.constant 0 : i32
    %11 = arith.cmpi eq, %arg3, %c0_i32_10 : i32
    %12 = arith.extui %11 : i1 to i32
    %c0_i32_11 = arith.constant 0 : i32
    %13 = arith.cmpi ne, %12, %c0_i32_11 : i32
    scf.if %13 {
      %c0_12 = arith.constant 0 : index
      %c0_13 = arith.constant 0 : index
      %14 = vector.load %arg7[%c0_12, %c0_13] : memref<128x128xf32, #tpu.memory_space<vmem>>, vector<128x128xf32>
      %c0_14 = arith.constant 0 : index
      %c0_15 = arith.constant 0 : index
      %c0_16 = arith.constant 0 : index
      %15 = vector.load %arg6[%c0_14, %c0_15, %c0_16] : memref<1x128x128xf32, #tpu.memory_space<vmem>>, vector<1x128x128xf32>
      %16 = vector.shape_cast %15 : vector<1x128x128xf32> to vector<128x128xf32>
      %17 = vector.shape_cast %14 : vector<128x128xf32> to vector<1x128x128xf32>
      tpu.vector_store %arg6[%c0_14, %c0_15, %c0_16], %17 {strides = array<i32>} : memref<1x128x128xf32, #tpu.memory_space<vmem>>, vector<1x128x128xf32>,
    } else {
    }
    return
  }
  func.func @transform_0(%arg0: i32, %arg1: i32, %arg2: i32, %arg3: i32) -> (i32, i32, i32) {
    %c0_i32 = arith.constant 0 : i32
    return %arg0, %arg3, %arg1 : i32, i32, i32
  }
  func.func @transform_1(%arg0: i32, %arg1: i32, %arg2: i32, %arg3: i32) -> (i32, i32, i32) {
    %c0_i32 = arith.constant 0 : i32
    return %arg0, %arg3, %arg2 : i32, i32, i32
  }
  func.func @transform_2(%arg0: i32, %arg1: i32, %arg2: i32, %arg3: i32) -> (i32, i32, i32) {
    %c0_i32 = arith.constant 0 : i32
    return %arg0, %arg1, %arg2 : i32, i32, i32
  }
}

</mosaic_0001>

<llo_original>
// kernel: tpu_custom_call.1
$region0: #{tpu_custom_call.1}
  #allocation0 [shape = 'u32[]', space=smem, size = 0x4, offset = 0x4, fixed_abs, tag = 'smem constant byte address 0x4 - core index']
  #allocation1 [shape = 'u32[72,128]{1,0:T(1,128)}', space=vmem, size = 0x9000, scoped, tag = 'internal scratch']
  #allocation2 [shape = 'f32[128,128]{1,0:T(8,128)}', space=vmem, size = 0x10000, scoped, tag = 'scratch operand']
  %s0 = inlined_call_operand.hbm [shape: f32[1,8,128], index: 0, kind: input, shape index: {}]
  %s1 = inlined_call_operand.hbm [shape: f32[1,8,128], index: 1, kind: input, shape index: {}]
  %s2 = inlined_call_operand.hbm [shape: f32[1,128,128], index: 2, kind: output, shape index: {}]
  %s3 = sld [smem:[#allocation0]]
  $region34: #{tpu_custom_call.1} parent=0
    _
  %s5 = ssub.s32 1, %s3
  %s6 = scalar_select 0, %s5, %s3
  $region1: #{tpu_custom_call.1} parent=0
    #allocation3 [shape = 'u8[4096]{0}', space=vmem, size = 0x1000, scoped, tag = 'input window, operand 0, single buffered']
    #allocation4 [shape = 's32[1]{0}', space=sflag, size = 0x4, scoped, tag = 'scoped memory for tpu_custom_call.1']
    #allocation5 [shape = 's32[1]{0}', space=sflag, size = 0x4, scoped, tag = 'scoped memory for tpu_custom_call.1']
    #allocation6 [shape = 'u8[4096]{0}', space=vmem, size = 0x1000, scoped, tag = 'input window, operand 1, single buffered']
    #allocation7 [shape = 's32[1]{0}', space=sflag, size = 0x4, scoped, tag = 'scoped memory for tpu_custom_call.1']
    #allocation8 [shape = 'u8[65536]{0}', space=vmem, size = 0x10000, scoped, tag = 'output window, operand 0, single buffered']
    %7 = vsyncpa [#allocation4], 0
    %8 = vsyncpa [#allocation7], 0
    %9 = vsyncpa [#allocation5], 0
    // Predicated region
    $region2: #{tpu_custom_call.1} parent=1 // pred_check
      _
    $region3: #{tpu_custom_call.1} parent=1 // pred_check_branch
      %11 = sbr.rel (0) target = $region5
    $region4: #{tpu_custom_call.1} parent=1 // pred_region
      %13 = vsyncadd [#allocation4], 0
      %s15 = sshll.u32 %s0, 4
      %s16 = int_to_ptr.hbm [resolvable:$true] %s15
      %s17 = sshll.u32 [#allocation3], 4
      %s18 = int_to_ptr.vmem [resolvable:$true] %s17
      %20 = dma.hbm_to_vmem [thread:$0]  %s16, 128, %s18, [#allocation4]
    $region5: #{tpu_custom_call.1} parent=1 // pred_fallthru
      _
    // Predicated region
    $region6: #{tpu_custom_call.1} parent=1 // pred_check
      _
    $region7: #{tpu_custom_call.1} parent=1 // pred_check_branch
      %22 = sbr.rel (0) target = $region9
    $region8: #{tpu_custom_call.1} parent=1 // pred_region
      %24 = vsyncadd [#allocation7], 0
      %s26 = sshll.u32 %s1, 4
      %s27 = int_to_ptr.hbm [resolvable:$true] %s26
      %s28 = sshll.u32 [#allocation6], 4
      %s29 = int_to_ptr.vmem [resolvable:$true] %s28
      %31 = dma.hbm_to_vmem [thread:$0]  %s27, 128, %s29, [#allocation7]
    $region9: #{tpu_custom_call.1} parent=1 // pred_fallthru
      _
    // Predicated region
    $region10: #{tpu_custom_call.1} parent=1 // pred_check
      _
    $region11: #{tpu_custom_call.1} parent=1 // pred_check_branch
      %33 = sbr.rel (0) target = $region13
    $region12: #{tpu_custom_call.1} parent=1 // pred_region
      %35 = dma.done [#allocation4], 128
    $region13: #{tpu_custom_call.1} parent=1 // pred_fallthru
      _
    // Predicated region
    $region14: #{tpu_custom_call.1} parent=1 // pred_check
      _
    $region15: #{tpu_custom_call.1} parent=1 // pred_check_branch
      %37 = sbr.rel (0) target = $region17
    $region16: #{tpu_custom_call.1} parent=1 // pred_region
      %39 = dma.done [#allocation7], 128
    $region17: #{tpu_custom_call.1} parent=1 // pred_fallthru
      _
    %p40 = scmp.eq.s32.totalorder 0, 0
    // Predicated region
    $region18: #{tpu_custom_call.1} parent=1 // pred_check
      %p41 = pneg %p40
    $region19: #{tpu_custom_call.1} parent=1 // pred_check_branch
      %43 = sbr.rel (%p41) target = $region21
    $region20: #{tpu_custom_call.1} parent=1 // pred_region
      %44 = vst [vmem:[#allocation2] sm:$0xff] 0.0
      %45 = vst [vmem:[#allocation2 + $0x8] sm:$0xff] 0.0
      %46 = vst [vmem:[#allocation2 + $0x10] sm:$0xff] 0.0
      %47 = vst [vmem:[#allocation2 + $0x18] sm:$0xff] 0.0
      %48 = vst [vmem:[#allocation2 + $0x20] sm:$0xff] 0.0
      %49 = vst [vmem:[#allocation2 + $0x28] sm:$0xff] 0.0
      %50 = vst [vmem:[#allocation2 + $0x30] sm:$0xff] 0.0
      %51 = vst [vmem:[#allocation2 + $0x38] sm:$0xff] 0.0
      %52 = vst [vmem:[#allocation2 + $0x40] sm:$0xff] 0.0
      %53 = vst [vmem:[#allocation2 + $0x48] sm:$0xff] 0.0
      %54 = vst [vmem:[#allocation2 + $0x50] sm:$0xff] 0.0
      %55 = vst [vmem:[#allocation2 + $0x58] sm:$0xff] 0.0
      %56 = vst [vmem:[#allocation2 + $0x60] sm:$0xff] 0.0
      %57 = vst [vmem:[#allocation2 + $0x68] sm:$0xff] 0.0
      %58 = vst [vmem:[#allocation2 + $0x70] sm:$0xff] 0.0
      %59 = vst [vmem:[#allocation2 + $0x78] sm:$0xff] 0.0
    $region21: #{tpu_custom_call.1} parent=1 // pred_fallthru
      _
    %v60 = vld [vmem:[#allocation2] sm:$0xff]
    %v61 = vld [vmem:[#allocation2 + $0x8] sm:$0xff]
    %v62 = vld [vmem:[#allocation2 + $0x10] sm:$0xff]
    %v63 = vld [vmem:[#allocation2 + $0x18] sm:$0xff]
    %v64 = vld [vmem:[#allocation2 + $0x20] sm:$0xff]
    %v65 = vld [vmem:[#allocation2 + $0x28] sm:$0xff]
    %v66 = vld [vmem:[#allocation2 + $0x30] sm:$0xff]
    %v67 = vld [vmem:[#allocation2 + $0x38] sm:$0xff]
    %v68 = vld [vmem:[#allocation2 + $0x40] sm:$0xff]
    %v69 = vld [vmem:[#allocation2 + $0x48] sm:$0xff]
    %v70 = vld [vmem:[#allocation2 + $0x50] sm:$0xff]
    %v71 = vld [vmem:[#allocation2 + $0x58] sm:$0xff]
    %v72 = vld [vmem:[#allocation2 + $0x60] sm:$0xff]
    %v73 = vld [vmem:[#allocation2 + $0x68] sm:$0xff]
    %v74 = vld [vmem:[#allocation2 + $0x70] sm:$0xff]
    %v75 = vld [vmem:[#allocation2 + $0x78] sm:$0xff]
    %v76 = vld [vmem:[#allocation3] sm:$0xff]
    %v77 = vld [vmem:[#allocation6] sm:$0xff]
    %78 = vxpose.xlu0.b32.start [1/16] %v76, 128
    %79 = vxpose.xlu0.b32.cont [2/16] 0.0, 128
    %80 = vxpose.xlu0.b32.cont [3/16] 0.0, 128
    %81 = vxpose.xlu0.b32.cont [4/16] 0.0, 128
    %82 = vxpose.xlu0.b32.cont [5/16] 0.0, 128
    %83 = vxpose.xlu0.b32.cont [6/16] 0.0, 128
    %84 = vxpose.xlu0.b32.cont [7/16] 0.0, 128
    %85 = vxpose.xlu0.b32.cont [8/16] 0.0, 128
    %86 = vxpose.xlu0.b32.cont [9/16] 0.0, 128
    %87 = vxpose.xlu0.b32.cont [10/16] 0.0, 128
    %88 = vxpose.xlu0.b32.cont [11/16] 0.0, 128
    %89 = vxpose.xlu0.b32.cont [12/16] 0.0, 128
    %90 = vxpose.xlu0.b32.cont [13/16] 0.0, 128
    %91 = vxpose.xlu0.b32.cont [14/16] 0.0, 128
    %92 = vxpose.xlu0.b32.cont [15/16] 0.0, 128
    %93 = vxpose.xlu0.b32.end [16/16] 0.0, 128
    %v94 = vpop.trf.xlu0
    %v95 = vpop.trf.xlu0
    %v96 = vpop.trf.xlu0
    %v97 = vpop.trf.xlu0
    %v98 = vpop.trf.xlu0
    %v99 = vpop.trf.xlu0
    %v100 = vpop.trf.xlu0
    %v101 = vpop.trf.xlu0
    %v102 = vpop.trf.xlu0
    %v103 = vpop.trf.xlu0
    %v104 = vpop.trf.xlu0
    %v105 = vpop.trf.xlu0
    %v106 = vpop.trf.xlu0
    %v107 = vpop.trf.xlu0
    %v108 = vpop.trf.xlu0
    %v109 = vpop.trf.xlu0
    %vm110 = vcmask 64512
    %v112 = vsel %vm110, %v94, 0
    %v115 = vsel %vm110, %v95, 0
    %v118 = vsel %vm110, %v96, 0
    %v121 = vsel %vm110, %v97, 0
    %v124 = vsel %vm110, %v98, 0
    %v127 = vsel %vm110, %v99, 0
    %v130 = vsel %vm110, %v100, 0
    %v133 = vsel %vm110, %v101, 0
    %v136 = vsel %vm110, %v102, 0
    %v139 = vsel %vm110, %v103, 0
    %v142 = vsel %vm110, %v104, 0
    %v145 = vsel %vm110, %v105, 0
    %v148 = vsel %vm110, %v106, 0
    %v151 = vsel %vm110, %v107, 0
    %v154 = vsel %vm110, %v108, 0
    %v157 = vsel %vm110, %v109, 0
    %159 = vmatpush.msra.mxu0 0.0
    %160 = vmatpush.msra.mxu0 0.0
    %161 = vmatpush.msra.mxu0 0.0
    %162 = vmatpush.msra.mxu0 0.0
    %163 = vmatpush.msra.mxu0 0.0
    %164 = vmatpush.msra.mxu0 0.0
    %165 = vmatpush.msra.mxu0 0.0
    %166 = vmatpush.msra.mxu0 0.0
    %167 = vmatpush.msra.mxu0 0.0
    %168 = vmatpush.msra.mxu0 0.0
    %169 = vmatpush.msra.mxu0 0.0
    %170 = vmatpush.msra.mxu0 0.0
    %171 = vmatpush.msra.mxu0 0.0
    %172 = vmatpush.msra.mxu0 0.0
    %173 = vmatpush.msra.mxu0 0.0
    %174 = vmatpush.msra.mxu0 %v77
    %175 = vmatmul.f32.gmra.mxu0 %v112
    %v176 = vpop.f32.mrf.mxu0
    %v177 = vadd.f32 0.0, %v176
    %178 = vmatmul.f32.gmra.mxu0 %v115
    %v179 = vpop.f32.mrf.mxu0
    %v180 = vadd.f32 0.0, %v179
    %181 = vmatmul.f32.gmra.mxu0 %v118
    %v182 = vpop.f32.mrf.mxu0
    %v183 = vadd.f32 0.0, %v182
    %184 = vmatmul.f32.gmra.mxu0 %v121
    %v185 = vpop.f32.mrf.mxu0
    %v186 = vadd.f32 0.0, %v185
    %187 = vmatmul.f32.gmra.mxu0 %v124
    %v188 = vpop.f32.mrf.mxu0
    %v189 = vadd.f32 0.0, %v188
    %190 = vmatmul.f32.gmra.mxu0 %v127
    %v191 = vpop.f32.mrf.mxu0
    %v192 = vadd.f32 0.0, %v191
    %193 = vmatmul.f32.gmra.mxu0 %v130
    %v194 = vpop.f32.mrf.mxu0
    %v195 = vadd.f32 0.0, %v194
    %196 = vmatmul.f32.gmra.mxu0 %v133
    %v197 = vpop.f32.mrf.mxu0
    %v198 = vadd.f32 0.0, %v197
    %199 = vmatmul.f32.gmra.mxu0 %v136
    %v200 = vpop.f32.mrf.mxu0
    %v201 = vadd.f32 0.0, %v200
    %202 = vmatmul.f32.gmra.mxu0 %v139
    %v203 = vpop.f32.mrf.mxu0
    %v204 = vadd.f32 0.0, %v203
    %205 = vmatmul.f32.gmra.mxu0 %v142
    %v206 = vpop.f32.mrf.mxu0
    %v207 = vadd.f32 0.0, %v206
    %208 = vmatmul.f32.gmra.mxu0 %v145
    %v209 = vpop.f32.mrf.mxu0
    %v210 = vadd.f32 0.0, %v209
    %211 = vmatmul.f32.gmra.mxu0 %v148
    %v212 = vpop.f32.mrf.mxu0
    %v213 = vadd.f32 0.0, %v212
    %214 = vmatmul.f32.gmra.mxu0 %v151
    %v215 = vpop.f32.mrf.mxu0
    %v216 = vadd.f32 0.0, %v215
    %217 = vmatmul.f32.gmra.mxu0 %v154
    %v218 = vpop.f32.mrf.mxu0
    %v219 = vadd.f32 0.0, %v218
    %220 = vmatmul.f32.gmra.mxu0 %v157
    %v221 = vpop.f32.mrf.mxu0
    %v222 = vadd.f32 0.0, %v221
    %223 = vdwg.mxu0
    %v224 = vadd.f32 %v60, %v177
    %v225 = vadd.f32 %v61, %v180
    %v226 = vadd.f32 %v62, %v183
    %v227 = vadd.f32 %v63, %v186
    %v228 = vadd.f32 %v64, %v189
    %v229 = vadd.f32 %v65, %v192
    %v230 = vadd.f32 %v66, %v195
    %v231 = vadd.f32 %v67, %v198
    %v232 = vadd.f32 %v68, %v201
    %v233 = vadd.f32 %v69, %v204
    %v234 = vadd.f32 %v70, %v207
    %v235 = vadd.f32 %v71, %v210
    %v236 = vadd.f32 %v72, %v213
    %v237 = vadd.f32 %v73, %v216
    %v238 = vadd.f32 %v74, %v219
    %v239 = vadd.f32 %v75, %v222
    %240 = vst [vmem:[#allocation2] sm:$0xff] %v224
    %241 = vst [vmem:[#allocation2 + $0x8] sm:$0xff] %v225
    %242 = vst [vmem:[#allocation2 + $0x10] sm:$0xff] %v226
    %243 = vst [vmem:[#allocation2 + $0x18] sm:$0xff] %v227
    %244 = vst [vmem:[#allocation2 + $0x20] sm:$0xff] %v228
    %245 = vst [vmem:[#allocation2 + $0x28] sm:$0xff] %v229
    %246 = vst [vmem:[#allocation2 + $0x30] sm:$0xff] %v230
    %247 = vst [vmem:[#allocation2 + $0x38] sm:$0xff] %v231
    %248 = vst [vmem:[#allocation2 + $0x40] sm:$0xff] %v232
    %249 = vst [vmem:[#allocation2 + $0x48] sm:$0xff] %v233
    %250 = vst [vmem:[#allocation2 + $0x50] sm:$0xff] %v234
    %251 = vst [vmem:[#allocation2 + $0x58] sm:$0xff] %v235
    %252 = vst [vmem:[#allocation2 + $0x60] sm:$0xff] %v236
    %253 = vst [vmem:[#allocation2 + $0x68] sm:$0xff] %v237
    %254 = vst [vmem:[#allocation2 + $0x70] sm:$0xff] %v238
    %255 = vst [vmem:[#allocation2 + $0x78] sm:$0xff] %v239
    // Predicated region
    $region22: #{tpu_custom_call.1} parent=1 // pred_check
      %p256 = pneg %p40
    $region23: #{tpu_custom_call.1} parent=1 // pred_check_branch
      %258 = sbr.rel (%p256) target = $region25
    $region24: #{tpu_custom_call.1} parent=1 // pred_region
      %v259 = vld [vmem:[#allocation2] sm:$0xff]
      %v260 = vld [vmem:[#allocation2 + $0x8] sm:$0xff]
      %v261 = vld [vmem:[#allocation2 + $0x10] sm:$0xff]
      %v262 = vld [vmem:[#allocation2 + $0x18] sm:$0xff]
      %v263 = vld [vmem:[#allocation2 + $0x20] sm:$0xff]
      %v264 = vld [vmem:[#allocation2 + $0x28] sm:$0xff]
      %v265 = vld [vmem:[#allocation2 + $0x30] sm:$0xff]
      %v266 = vld [vmem:[#allocation2 + $0x38] sm:$0xff]
      %v267 = vld [vmem:[#allocation2 + $0x40] sm:$0xff]
      %v268 = vld [vmem:[#allocation2 + $0x48] sm:$0xff]
      %v269 = vld [vmem:[#allocation2 + $0x50] sm:$0xff]
      %v270 = vld [vmem:[#allocation2 + $0x58] sm:$0xff]
      %v271 = vld [vmem:[#allocation2 + $0x60] sm:$0xff]
      %v272 = vld [vmem:[#allocation2 + $0x68] sm:$0xff]
      %v273 = vld [vmem:[#allocation2 + $0x70] sm:$0xff]
      %v274 = vld [vmem:[#allocation2 + $0x78] sm:$0xff]
      %275 = vst [vmem:[#allocation8] sm:$0xff] %v259
      %276 = vst [vmem:[#allocation8 + $0x8] sm:$0xff] %v260
      %277 = vst [vmem:[#allocation8 + $0x10] sm:$0xff] %v261
      %278 = vst [vmem:[#allocation8 + $0x18] sm:$0xff] %v262
      %279 = vst [vmem:[#allocation8 + $0x20] sm:$0xff] %v263
      %280 = vst [vmem:[#allocation8 + $0x28] sm:$0xff] %v264
      %281 = vst [vmem:[#allocation8 + $0x30] sm:$0xff] %v265
      %282 = vst [vmem:[#allocation8 + $0x38] sm:$0xff] %v266
      %283 = vst [vmem:[#allocation8 + $0x40] sm:$0xff] %v267
      %284 = vst [vmem:[#allocation8 + $0x48] sm:$0xff] %v268
      %285 = vst [vmem:[#allocation8 + $0x50] sm:$0xff] %v269
      %286 = vst [vmem:[#allocation8 + $0x58] sm:$0xff] %v270
      %287 = vst [vmem:[#allocation8 + $0x60] sm:$0xff] %v271
      %288 = vst [vmem:[#allocation8 + $0x68] sm:$0xff] %v272
      %289 = vst [vmem:[#allocation8 + $0x70] sm:$0xff] %v273
      %290 = vst [vmem:[#allocation8 + $0x78] sm:$0xff] %v274
    $region25: #{tpu_custom_call.1} parent=1 // pred_fallthru
      _
    // Predicated region
    $region26: #{tpu_custom_call.1} parent=1 // pred_check
      _
    $region27: #{tpu_custom_call.1} parent=1 // pred_check_branch
      %292 = sbr.rel (0) target = $region29
    $region28: #{tpu_custom_call.1} parent=1 // pred_region
      %294 = vsyncadd [#allocation5], 0
      %s295 = sshll.u32 [#allocation8], 4
      %s296 = int_to_ptr.vmem [resolvable:$true] %s295
      %s297 = sshll.u32 %s2, 4
      %s298 = int_to_ptr.hbm [resolvable:$true] %s297
      %303 = dma.vmem_to_hbm [thread:$0]  %s296, 2048, %s298, [#allocation5], 128, 128, 8
    $region29: #{tpu_custom_call.1} parent=1 // pred_fallthru
      _
    // Predicated region
    $region30: #{tpu_custom_call.1} parent=1 // pred_check
      _
    $region31: #{tpu_custom_call.1} parent=1 // pred_check_branch
      %305 = sbr.rel (0) target = $region33
    $region32: #{tpu_custom_call.1} parent=1 // pred_region
      %307 = dma.done [#allocation5], 2048
    $region33: #{tpu_custom_call.1} parent=1 // pred_fallthru
      _
    %308 = vsyncpa [#allocation4], 1
    %309 = vsyncpa [#allocation7], 1
    %310 = vsyncpa [#allocation5], 1

</llo_original>
